<compile_context>
chip_gen: v7x
topology: tpu7x:2x2x1
jax: 0.10.0
libtpu: 0.0.40
codegen_flags: <defaults>
</compile_context>

<pallas_src>
import math

import jax
import jax.numpy as jnp
import numpy as np
from jax.experimental import pallas as pl
from jax.experimental.pallas import tpu as pltpu

EPS = 1e-5          # torch.nn.LayerNorm default eps
NEG_BIG = -1e30     # finite large-negative mask bias (robust vs. finfo.min)
ROW_TILE = 256      # row tile for projection / FFN kernels


def _layernorm(x, g, b):
    mu = jnp.mean(x, axis=-1, keepdims=True)
    var = jnp.mean((x - mu) ** 2, axis=-1, keepdims=True)
    return (x - mu) * jax.lax.rsqrt(var + EPS) * g + b


# ---------------------------------------------------------------------------
# Kernel 1: entity LayerNorm + fused fc_head|fc_tail|fc_ent projection (one MXU matmul)
# ---------------------------------------------------------------------------
def ent_proj_kernel(x_ref, g_ref, b_ref, w_ref, o_ref):
    xn = _layernorm(x_ref[...], g_ref[...], b_ref[...])       # f32
    o_ref[...] = jnp.dot(xn.astype(jnp.bfloat16), w_ref[...],  # bf16 x bf16 -> f32 acc
                         preferred_element_type=jnp.float32)


def ent_project(x, g, b, w_fused_bf16):
    N, F = x.shape
    C = w_fused_bf16.shape[1]                                  # 3 * HD
    tn = min(ROW_TILE, N)
    return pl.pallas_call(
        ent_proj_kernel,
        grid=(pl.cdiv(N, tn),),
        in_specs=[pl.BlockSpec((tn, F), lambda i: (i, 0)),
                  pl.BlockSpec((1, F), lambda i: (0, 0)),
                  pl.BlockSpec((1, F), lambda i: (0, 0)),
                  pl.BlockSpec((F, C), lambda i: (0, 0))],      # weights resident
        out_specs=pl.BlockSpec((tn, C), lambda i: (i, 0)),
        out_shape=jax.ShapeDtypeStruct((N, C), jnp.float32),
        compiler_params=pltpu.CompilerParams(dimension_semantics=("parallel",)),
    )(x, g, b, w_fused_bf16)


# ---------------------------------------------------------------------------
# Kernel 2: relation LayerNorm + fc_rel projection (R is tiny -> single block)
# ---------------------------------------------------------------------------
def rel_proj_kernel(x_ref, g_ref, b_ref, w_ref, o_ref):
    xn = _layernorm(x_ref[...], g_ref[...], b_ref[...])
    o_ref[...] = jnp.dot(xn.astype(jnp.bfloat16), w_ref[...],
                         preferred_element_type=jnp.float32)


def rel_project(x, g, b, w_bf16):
    R, F = x.shape
    HD = w_bf16.shape[1]
    return pl.pallas_call(
        rel_proj_kernel,
        grid=(1,),
        in_specs=[pl.BlockSpec((R, F), lambda i: (0, 0)),
                  pl.BlockSpec((1, F), lambda i: (0, 0)),
                  pl.BlockSpec((1, F), lambda i: (0, 0)),
                  pl.BlockSpec((F, HD), lambda i: (0, 0))],
        out_specs=pl.BlockSpec((R, HD), lambda i: (0, 0)),
        out_shape=jax.ShapeDtypeStruct((R, HD), jnp.float32),
    )(x, g, b, w_bf16)


# ---------------------------------------------------------------------------
# Kernel 3: relation-aware attention scores (per-relation MXU decomposition),
# edge softmax over incoming edges, hop_num-step PPR diffusion, residual add.
# All heads processed in one invocation; data stays in (N, H*D) layout so the
# output block is lane-dense and no head-major transposes are needed.
# ---------------------------------------------------------------------------
def make_attn_ppr_kernel(num_heads, head_dim, num_rels, alpha, hop_num):
    H, D, R = num_heads, head_dim, num_rels
    HD = H * D
    inv_sqrt_d = 1.0 / math.sqrt(D)

    def kernel(kqv_ref, rel_ref, rid_ref, adj_ref, login_ref, res_ref, o_ref):
        kqv = kqv_ref[...]                                   # (N, 3*HD) f32: [k | q | v]
        rel = rel_ref[...]                                   # (R, HD)   f32
        rid = rid_ref[...]                                   # (N, N)    int32 [dst, src]
        adj = adj_ref[...]                                   # (N, N)    {0,1} [dst, src]
        res = res_ref[...]                                   # (N, HD)   f32 (Identity res_fc)

        # Hoisted once (not per relation / per hop): mask bias and log_in scaling.
        mask_bias = jnp.where(adj > 0.0, 0.0, NEG_BIG)       # (N, N)
        login_scale = login_ref[...] * inv_sqrt_d            # (N, 1) dst 'log_in' / sqrt(D)

        cols = []
        for h in range(H):                                   # small static head loop
            k_h = kqv[:, h * D:(h + 1) * D]                  # src 'k' = fc_head
            q_h = kqv[:, HD + h * D:HD + (h + 1) * D]        # dst 'q' = fc_tail
            v_h = kqv[:, 2 * HD + h * D:2 * HD + (h + 1) * D]  # src 'v' = fc_ent
            k_bf = k_h.astype(jnp.bfloat16)

            # e[i, j] = sum_d q[i,d] * k[j,d] * rel[rid[i,j], d]
            # per-relation MXU matmuls + selects instead of an (N, N, D) outer product.
            e = jnp.zeros(adj.shape, jnp.float32)
            for r in range(R):
                qr = (q_h * rel[r, h * D:(h + 1) * D][None, :]).astype(jnp.bfloat16)
                s_r = jax.lax.dot_general(                    # (N_dst, N_src) on the MXU
                    qr, k_bf, (((1,), (1,)), ((), ())),
                    preferred_element_type=jnp.float32)
                e = jnp.where(rid == r, s_r, e)

            e = e * login_scale + mask_bias                   # e_mul_v('e','log_in')/sqrt(D) + mask

            # edge_softmax over incoming edges of each destination node (f32)
            m = jnp.max(e, axis=-1, keepdims=True)
            p = jnp.exp(e - m) * adj
            denom = jnp.maximum(jnp.sum(p, axis=-1, keepdims=True), 1e-20)  # 0-in-degree guard
            a = p * pl.reciprocal(denom, approx=True)         # EUP reciprocal (free slot)
            a_bf = a.astype(jnp.bfloat16)

            # ppr_estimation: feat <- (1-alpha) * A @ feat + alpha * feat_0   (blend in f32)
            feat0 = v_h
            feat = feat0
            for _ in range(hop_num):
                nf = jnp.dot(a_bf, feat.astype(jnp.bfloat16),
                             preferred_element_type=jnp.float32)
                feat = (1.0 - alpha) * nf + alpha * feat0

            cols.append(feat + res[:, h * D:(h + 1) * D])     # residual (a_i = b_i = 1)

        o_ref[...] = jnp.concatenate(cols, axis=-1)           # (N, HD) lane-dense store

    return kernel


def attn_ppr(kqv, rel_p, rid, adj, log_in, res, *, num_heads, hop_num, alpha):
    N, HD = res.shape
    R = rel_p.shape[0]
    D = HD // num_heads
    kernel = make_attn_ppr_kernel(num_heads, D, R, alpha, hop_num)
    return pl.pallas_call(
        kernel,
        grid=(1,),
        in_specs=[pl.BlockSpec((N, 3 * HD), lambda i: (0, 0)),
                  pl.BlockSpec((R, HD), lambda i: (0, 0)),
                  pl.BlockSpec((N, N), lambda i: (0, 0)),
                  pl.BlockSpec((N, N), lambda i: (0, 0)),
                  pl.BlockSpec((N, 1), lambda i: (0, 0)),
                  pl.BlockSpec((N, HD), lambda i: (0, 0))],
        out_specs=pl.BlockSpec((N, HD), lambda i: (0, 0)),
        out_shape=jax.ShapeDtypeStruct((N, HD), jnp.float32),
        compiler_params=pltpu.CompilerParams(dimension_semantics=("arbitrary",)),
    )(kqv, rel_p, rid, adj, log_in, res)


# ---------------------------------------------------------------------------
# Kernel 4: ff_layer_norm + PositionWiseFeedForward + residual (row-tiled)
# TODO(synk): PositionWiseFeedForward's source was not provided; the standard
#             Linear -> ReLU -> Linear (biases, dropout=identity in eval) is used.
# ---------------------------------------------------------------------------
def ffn_kernel(x_ref, g_ref, b_ref, w1_ref, b1_ref, w2_ref, b2_ref, o_ref):
    x = x_ref[...]
    xn = _layernorm(x, g_ref[...], b_ref[...])
    h = jnp.dot(xn.astype(jnp.bfloat16), w1_ref[...],
                preferred_element_type=jnp.float32) + b1_ref[...]
    h = jnp.maximum(h, 0.0)
    ff = jnp.dot(h.astype(jnp.bfloat16), w2_ref[...],
                 preferred_element_type=jnp.float32) + b2_ref[...]
    o_ref[...] = ff + x       # ff_b_i * ff_rst + ff_a_i * rst with a_i = b_i = 1


def ffn(x, g, b, w1_bf16, b1, w2_bf16, b2):
    N, F = x.shape
    Dh = w1_bf16.shape[1]
    tn = min(ROW_TILE, N)
    return pl.pallas_call(
        ffn_kernel,
        grid=(pl.cdiv(N, tn),),
        in_specs=[pl.BlockSpec((tn, F), lambda i: (i, 0)),
                  pl.BlockSpec((1, F), lambda i: (0, 0)),
                  pl.BlockSpec((1, F), lambda i: (0, 0)),
                  pl.BlockSpec((F, Dh), lambda i: (0, 0)),    # weights resident
                  pl.BlockSpec((1, Dh), lambda i: (0, 0)),
                  pl.BlockSpec((Dh, F), lambda i: (0, 0)),
                  pl.BlockSpec((1, F), lambda i: (0, 0))],
        out_specs=pl.BlockSpec((tn, F), lambda i: (i, 0)),
        out_shape=jax.ShapeDtypeStruct((N, F), jnp.float32),
        compiler_params=pltpu.CompilerParams(dimension_semantics=("parallel",)),
    )(x, g, b, w1_bf16, b1, w2_bf16, b2)


# ---------------------------------------------------------------------------
# Full forward (no transposes, no per-edge relation gather in the wrapper)
# ---------------------------------------------------------------------------
def rgdt_layer_v2_forward(params, ent_feat, rel_feat, adj, rid, log_in,
                          *, num_heads, hop_num, alpha):
    # torch Linear weight is (out, in) -> transpose; fuse head|tail|ent into one matmul.
    w_kqv = jnp.concatenate([params["w_head"].T, params["w_tail"].T,
                             params["w_ent"].T], axis=1).astype(jnp.bfloat16)
    kqv = ent_project(ent_feat,
                      params["ln_ent_g"][None, :], params["ln_ent_b"][None, :],
                      w_kqv)                                        # (N, 3*HD) = [k | q | v]
    rel_p = rel_project(rel_feat,
                        params["ln_rel_g"][None, :], params["ln_rel_b"][None, :],
                        params["w_rel"].T.astype(jnp.bfloat16))     # (R, HD)

    # Identity res_fc (in_ent_feats == out_ent_feats): residual is ent_feat itself.
    rst = attn_ppr(kqv, rel_p, rid, adj, log_in, ent_feat,
                   num_heads=num_heads, hop_num=hop_num, alpha=alpha)  # (N, HD)

    out = ffn(rst,
              params["ln_ff_g"][None, :], params["ln_ff_b"][None, :],
              params["w1"].T.astype(jnp.bfloat16), params["b1"][None, :],
              params["w2"].T.astype(jnp.bfloat16), params["b2"][None, :])
    return out


# ---------------------------------------------------------------------------
# Pure-JAX f32 reference (module semantics) for the correctness check
# ---------------------------------------------------------------------------
def reference_forward(params, ent_feat, rel_feat, adj, rid, log_in,
                      *, num_heads, hop_num, alpha):
    N, _ = ent_feat.shape
    H = num_heads
    HD = params["w_head"].shape[0]
    D = HD // H

    def ln(x, g, b):
        mu = x.mean(-1, keepdims=True)
        var = ((x - mu) ** 2).mean(-1, keepdims=True)
        return (x - mu) / jnp.sqrt(var + EPS) * g + b

    xn = ln(ent_feat, params["ln_ent_g"], params["ln_ent_b"])
    k = (xn @ params["w_head"].T).reshape(N, H, D)
    q = (xn @ params["w_tail"].T).reshape(N, H, D)
    v = (xn @ params["w_ent"].T).reshape(N, H, D)
    rn = ln(rel_feat, params["ln_rel_g"], params["ln_rel_b"])
    rel = (rn @ params["w_rel"].T).reshape(-1, H, D)
    rel_e = rel[rid]                                    # (N, N, H, D)
    e = jnp.einsum("jhd,ihd,ijhd->ijh", k, q, rel_e)
    e = e * log_in[:, :, None] / math.sqrt(D)
    e = jnp.where(adj[:, :, None] > 0, e, -jnp.inf)
    a = jax.nn.softmax(e, axis=1)
    feat0 = v
    feat = feat0
    for _ in range(hop_num):
        nf = jnp.einsum("ijh,jhd->ihd", a, feat)
        feat = (1.0 - alpha) * nf + alpha * feat0
    rst = (feat + ent_feat.reshape(N, H, D)).reshape(N, HD)
    xf = ln(rst, params["ln_ff_g"], params["ln_ff_b"])
    hdn = jnp.maximum(xf @ params["w1"].T + params["b1"], 0.0)
    ff = hdn @ params["w2"].T + params["b2"]
    return ff + rst


# ---------------------------------------------------------------------------
def xavier_normal(key, out_f, in_f, gain):
    std = gain * math.sqrt(2.0 / (in_f + out_f))
    return std * jax.random.normal(key, (out_f, in_f), dtype=jnp.float32)


if __name__ == "__main__":
    N, F_ENT, F_REL, H, D, R = 8, 32, 16, 4, 8, 3
    OUT = H * D                       # in_ent_feats == out_ent_feats == 32
    HOP, ALPHA = 3, 0.15

    key = jax.random.PRNGKey(0)
    keys = jax.random.split(key, 12)
    gain = math.sqrt(2.0 / (F_ENT + OUT))   # small_init_gain stand-in, layer_num=1

    params = {
        "w_head": xavier_normal(keys[0], OUT, F_ENT, gain),
        "w_tail": xavier_normal(keys[1], OUT, F_ENT, gain),
        "w_ent":  xavier_normal(keys[2], OUT, F_ENT, gain),
        "w_rel":  xavier_normal(keys[3], OUT, F_REL, gain),
        "ln_ent_g": jnp.ones((F_ENT,), jnp.float32),
        "ln_ent_b": jnp.zeros((F_ENT,), jnp.float32),
        "ln_rel_g": jnp.ones((F_REL,), jnp.float32),
        "ln_rel_b": jnp.zeros((F_REL,), jnp.float32),
        "ln_ff_g": jnp.ones((OUT,), jnp.float32),
        "ln_ff_b": jnp.zeros((OUT,), jnp.float32),
        "w1": xavier_normal(keys[4], 4 * OUT, OUT, 1.0),
        "b1": 0.01 * jnp.arange(4 * OUT, dtype=jnp.float32),
        "w2": xavier_normal(keys[5], OUT, 4 * OUT, 1.0),
        "b2": 0.01 * jnp.arange(OUT, dtype=jnp.float32),
    }

    ent = jax.random.normal(keys[6], (N, F_ENT), dtype=jnp.float32)
    rel = jax.random.normal(keys[7], (R, F_REL), dtype=jnp.float32)
    adj = (jax.random.uniform(keys[8], (N, N)) < 0.6).astype(jnp.float32)
    adj = jnp.maximum(adj, jnp.eye(N, dtype=jnp.float32))   # no 0-in-degree nodes
    rid = jax.random.randint(keys[9], (N, N), 0, R, dtype=jnp.int32)
    in_deg = jnp.sum(adj, axis=1, keepdims=True)
    log_in = jnp.log(in_deg)                                # graph.ndata['log_in']

    out = rgdt_layer_v2_forward(params, ent, rel, adj, rid, log_in,
                                num_heads=H, hop_num=HOP, alpha=ALPHA)
    out = jax.block_until_ready(out)

    ref = reference_forward(params, ent, rel, adj, rid, log_in,
                            num_heads=H, hop_num=HOP, alpha=ALPHA)
    # Tolerance reflects bf16 MXU operands (f32 accumulation) + approx EUP reciprocal
    # in the kernels vs. the pure-f32 reference.
    np.testing.assert_allclose(np.asarray(out), np.asarray(ref),
                               rtol=5e-2, atol=5e-2)
    print("KERNEL_OK")
</pallas_src>

<mosaic_0001>
module attributes {stable_mosaic.version = 11 : i64} {
  func.func @ent_proj_kernel(%arg0: i32, %arg1: memref<8x32xf32, #tpu.memory_space<vmem>>, %arg2: memref<1x32xf32, #tpu.memory_space<vmem>>, %arg3: memref<1x32xf32, #tpu.memory_space<vmem>>, %arg4: memref<32x96xbf16, #tpu.memory_space<vmem>>, %arg5: memref<8x96xf32, #tpu.memory_space<vmem>>) attributes {dimension_semantics = [#tpu.dimension_semantics<parallel>], iteration_bounds = array<i64: 1>, scalar_prefetch = 0 : i64, scratch_operands = 0 : i64, tpu.core_type = #tpu.core_type<tc>, window_params = [{transform_indices = @transform_0, window_bounds = array<i64: 8, 32>}, {pipeline_mode = #tpu.pipeline_mode<synchronous>, transform_indices = @transform_1, window_bounds = array<i64: 1, 32>}, {pipeline_mode = #tpu.pipeline_mode<synchronous>, transform_indices = @transform_2, window_bounds = array<i64: 1, 32>}, {pipeline_mode = #tpu.pipeline_mode<synchronous>, transform_indices = @transform_3, window_bounds = array<i64: 32, 96>}, {transform_indices = @transform_4, window_bounds = array<i64: 8, 96>}]} {
    %c0 = arith.constant 0 : index
    %c0_0 = arith.constant 0 : index
    %0 = vector.load %arg1[%c0, %c0_0] : memref<8x32xf32, #tpu.memory_space<vmem>>, vector<8x32xf32>
    %c0_1 = arith.constant 0 : index
    %c0_2 = arith.constant 0 : index
    %1 = vector.load %arg2[%c0_1, %c0_2] : memref<1x32xf32, #tpu.memory_space<vmem>>, vector<1x32xf32>
    %c0_3 = arith.constant 0 : index
    %c0_4 = arith.constant 0 : index
    %2 = vector.load %arg3[%c0_3, %c0_4] : memref<1x32xf32, #tpu.memory_space<vmem>>, vector<1x32xf32>
    %cst = arith.constant dense<0.000000e+00> : vector<8xf32>
    %3 = vector.multi_reduction <add>, %0, %cst [1] : vector<8x32xf32> to vector<8xf32>
    %4 = vector.shape_cast %3 : vector<8xf32> to vector<8x1xf32>
    %cst_5 = arith.constant 3.200000e+01 : f32
    %5 = vector.broadcast %cst_5 : f32 to vector<8x1xf32>
    %6 = arith.divf %4, %5 : vector<8x1xf32>
    %7 = vector.broadcast %6 : vector<8x1xf32> to vector<8x32xf32>
    %8 = arith.subf %0, %7 : vector<8x32xf32>
    %9 = arith.mulf %8, %8 : vector<8x32xf32>
    %cst_6 = arith.constant dense<0.000000e+00> : vector<8xf32>
    %10 = vector.multi_reduction <add>, %9, %cst_6 [1] : vector<8x32xf32> to vector<8xf32>
    %11 = vector.shape_cast %10 : vector<8xf32> to vector<8x1xf32>
    %cst_7 = arith.constant 3.200000e+01 : f32
    %12 = vector.broadcast %cst_7 : f32 to vector<8x1xf32>
    %13 = arith.divf %11, %12 : vector<8x1xf32>
    %14 = vector.broadcast %6 : vector<8x1xf32> to vector<8x32xf32>
    %15 = arith.subf %0, %14 : vector<8x32xf32>
    %cst_8 = arith.constant 9.99999974E-6 : f32
    %16 = vector.broadcast %cst_8 : f32 to vector<8x1xf32>
    %17 = arith.addf %13, %16 : vector<8x1xf32>
    %18 = math.rsqrt %17 : vector<8x1xf32>
    %19 = vector.broadcast %18 : vector<8x1xf32> to vector<8x32xf32>
    %20 = arith.mulf %15, %19 : vector<8x32xf32>
    %21 = vector.broadcast %1 : vector<1x32xf32> to vector<8x32xf32>
    %22 = arith.mulf %20, %21 : vector<8x32xf32>
    %23 = vector.broadcast %2 : vector<1x32xf32> to vector<8x32xf32>
    %24 = arith.addf %22, %23 : vector<8x32xf32>
    %25 = arith.truncf %24 : vector<8x32xf32> to vector<8x32xbf16>
    %c0_9 = arith.constant 0 : index
    %c0_10 = arith.constant 0 : index
    %26 = vector.load %arg4[%c0_9, %c0_10] : memref<32x96xbf16, #tpu.memory_space<vmem>>, vector<32x96xbf16>
    %cst_11 = arith.constant dense<0.000000e+00> : vector<8x96xf32>
    %27 = tpu.matmul %25, %26, %cst_11 {dimension_numbers = #tpu.dot_dimension_numbers<[1], [0], [0], [1], [0, 0, 1, 1], [], []>} : vector<8x32xbf16>, vector<32x96xbf16>, vector<8x96xf32> -> vector<8x96xf32>
    %c0_12 = arith.constant 0 : index
    %c0_13 = arith.constant 0 : index
    %28 = vector.load %arg5[%c0_12, %c0_13] : memref<8x96xf32, #tpu.memory_space<vmem>>, vector<8x96xf32>
    tpu.vector_store %arg5[%c0_12, %c0_13], %27 {strides = array<i32>} : memref<8x96xf32, #tpu.memory_space<vmem>>, vector<8x96xf32>,
    return
  }
  func.func @transform_0(%arg0: i32) -> (i32, i32) {
    %c0_i32 = arith.constant 0 : i32
    %c0_i32_0 = arith.constant 0 : i32
    return %arg0, %c0_i32 : i32, i32
  }
  func.func @transform_1(%arg0: i32) -> (i32, i32) {
    %c0_i32 = arith.constant 0 : i32
    %c0_i32_0 = arith.constant 0 : i32
    %c0_i32_1 = arith.constant 0 : i32
    return %c0_i32, %c0_i32_0 : i32, i32
  }
  func.func @transform_2(%arg0: i32) -> (i32, i32) {
    %c0_i32 = arith.constant 0 : i32
    %c0_i32_0 = arith.constant 0 : i32
    %c0_i32_1 = arith.constant 0 : i32
    return %c0_i32, %c0_i32_0 : i32, i32
  }
  func.func @transform_3(%arg0: i32) -> (i32, i32) {
    %c0_i32 = arith.constant 0 : i32
    %c0_i32_0 = arith.constant 0 : i32
    %c0_i32_1 = arith.constant 0 : i32
    return %c0_i32, %c0_i32_0 : i32, i32
  }
  func.func @transform_4(%arg0: i32) -> (i32, i32) {
    %c0_i32 = arith.constant 0 : i32
    %c0_i32_0 = arith.constant 0 : i32
    return %arg0, %c0_i32 : i32, i32
  }
}

</mosaic_0001>

<llo_original>
// kernel: tpu_custom_call.1
$region0: #{tpu_custom_call.1}
  #allocation0 [shape = 'u32[]', space=smem, size = 0x4, offset = 0x4, fixed_abs, tag = 'smem constant byte address 0x4 - core index']
  #allocation1 [shape = 'u32[144,128]{1,0:T(1,128)}', space=vmem, size = 0x12000, scoped, tag = 'internal scratch']
  %s0 = inlined_call_operand.hbm [shape: f32[8,32], index: 0, kind: input, shape index: {}]
  %s1 = inlined_call_operand.vmem [shape: f32[1,32], index: 1, kind: input, shape index: {}]
  %s2 = inlined_call_operand.vmem [shape: f32[1,32], index: 2, kind: input, shape index: {}]
  %s3 = inlined_call_operand.hbm [shape: bf16[32,96], index: 3, kind: input, shape index: {}]
  %s4 = inlined_call_operand.hbm [shape: f32[8,96], index: 4, kind: output, shape index: {}]
  %s5 = sld [smem:[#allocation0]]
  $region34: #{tpu_custom_call.1} parent=0
    _
  %s7 = ssub.s32 1, %s5
  %s8 = scalar_select 0, %s7, %s5
  $region1: #{tpu_custom_call.1} parent=0
    #allocation2 [shape = 'u8[4096]{0}', space=vmem, size = 0x1000, scoped, tag = 'input window, operand 0, single buffered']
    #allocation3 [shape = 's32[1]{0}', space=sflag, size = 0x4, scoped, tag = 'scoped memory for tpu_custom_call.1']
    #allocation4 [shape = 's32[1]{0}', space=sflag, size = 0x4, scoped, tag = 'scoped memory for tpu_custom_call.1']
    #allocation5 [shape = 'u8[8192]{0}', space=vmem, size = 0x2000, scoped, tag = 'input window, operand 3, single buffered']
    #allocation6 [shape = 's32[1]{0}', space=sflag, size = 0x4, scoped, tag = 'scoped memory for tpu_custom_call.1']
    #allocation7 [shape = 'u8[4096]{0}', space=vmem, size = 0x1000, scoped, tag = 'output window, operand 0, single buffered']
    %9 = vsyncpa [#allocation3], 0
    %10 = vsyncpa [#allocation6], 0
    %11 = vsyncpa [#allocation4], 0
    // Predicated region
    $region2: #{tpu_custom_call.1} parent=1 // pred_check
      _
    $region3: #{tpu_custom_call.1} parent=1 // pred_check_branch
      %13 = sbr.rel (0) target = $region5
    $region4: #{tpu_custom_call.1} parent=1 // pred_region
      %s15 = ssub.s32 128, 128
      %16 = vsyncadd [#allocation3], %s15
      %s18 = sshll.u32 [#allocation2], 4
      %s19 = int_to_ptr.vmem [resolvable:$true] %s18
      %21 = dma.hbm_to_vmem [thread:$0]  %s0, 128, %s19, [#allocation3]
    $region5: #{tpu_custom_call.1} parent=1 // pred_fallthru
      _
    // Predicated region
    $region6: #{tpu_custom_call.1} parent=1 // pred_check
      _
    $region7: #{tpu_custom_call.1} parent=1 // pred_check_branch
      %23 = sbr.rel (0) target = $region9
    $region8: #{tpu_custom_call.1} parent=1 // pred_region
      _
    $region9: #{tpu_custom_call.1} parent=1 // pred_fallthru
      _
    // Predicated region
    $region10: #{tpu_custom_call.1} parent=1 // pred_check
      _
    $region11: #{tpu_custom_call.1} parent=1 // pred_check_branch
      %25 = sbr.rel (0) target = $region13
    $region12: #{tpu_custom_call.1} parent=1 // pred_region
      _
    $region13: #{tpu_custom_call.1} parent=1 // pred_fallthru
      _
    // Predicated region
    $region14: #{tpu_custom_call.1} parent=1 // pred_check
      _
    $region15: #{tpu_custom_call.1} parent=1 // pred_check_branch
      %27 = sbr.rel (0) target = $region17
    $region16: #{tpu_custom_call.1} parent=1 // pred_region
      %s29 = ssub.s32 256, 256
      %30 = vsyncadd [#allocation6], %s29
      %s31 = sshll.u32 [#allocation5], 4
      %s32 = int_to_ptr.vmem [resolvable:$true] %s31
      %37 = dma.hbm_to_vmem [thread:$0]  %s3, 256, %s32, [#allocation6], 64, 64, 4
    $region17: #{tpu_custom_call.1} parent=1 // pred_fallthru
      _
    // Predicated region
    $region18: #{tpu_custom_call.1} parent=1 // pred_check
      _
    $region19: #{tpu_custom_call.1} parent=1 // pred_check_branch
      %39 = sbr.rel (0) target = $region21
    $region20: #{tpu_custom_call.1} parent=1 // pred_region
      %40 = dma.done [#allocation3], 128
    $region21: #{tpu_custom_call.1} parent=1 // pred_fallthru
      _
    // Predicated region
    $region22: #{tpu_custom_call.1} parent=1 // pred_check
      _
    $region23: #{tpu_custom_call.1} parent=1 // pred_check_branch
      %42 = sbr.rel (0) target = $region25
    $region24: #{tpu_custom_call.1} parent=1 // pred_region
      %43 = dma.done [#allocation6], 256
    $region25: #{tpu_custom_call.1} parent=1 // pred_fallthru
      _
    %v45 = vld [vmem:[#allocation2] sm:$0xff]
    %v46 = vld [vmem:[%s1] sm:$0x1]
    %v47 = vld [vmem:[%s2] sm:$0x1]
    %vm48 = vcmask 261120
    %v49 = vsel %vm48, %v45, 0.0
    %50 = vadd.xlane.f32.xlu0 %v49
    %v51 = vpop.xlane.xlu0 %50
    %v52 = vrcp.pop 32.0
    %v53 = vmul.f32 %v51, %v52
    %v54 = vsub.f32 %v45, %v53
    %v55 = vmul.f32 %v54, %v54
    %v56 = vsel %vm48, %v55, 0.0
    %57 = vadd.xlane.f32.xlu0 %v56
    %v58 = vpop.xlane.xlu0 %57
    %v59 = vmul.f32 %v58, %v52
    %v60 = vadd.f32 %v59, 1e-05
    %v61 = vrsqrt.pop %v60
    %v62 = vmul.f32 %v54, %v61
    %v64 = vlaneseq
    %v65 = vshrl.u32 %v64, 7
    %v66 = vsub.s32 0, %v65
    %v67 = vrot.slane %v46, %v66
    %v69 = vmul.f32 %v62, %v67
    %v71 = vlaneseq
    %v72 = vshrl.u32 %v71, 7
    %v73 = vsub.s32 0, %v72
    %v74 = vrot.slane %v47, %v73
    %v76 = vadd.f32 %v69, %v74
    %v77 = vpack.c.bf16 %v76, %v76
    %v78 = vld [vmem:[#allocation5] sm:$0xf]
    %v79 = vld [vmem:[#allocation5 + $0x4] sm:$0xf]
    %v80 = vld [vmem:[#allocation5 + $0x8] sm:$0xf]
    %v81 = vld [vmem:[#allocation5 + $0xc] sm:$0xf]
    %v86 = vunpack.c.l.b16 %v78
    %v87 = vunpack.c.l.b16 %v79
    %v88 = vunpack.c.l.b16 %v80
    %v89 = vunpack.c.l.b16 %v81
    %v90 = vpack.c.b16 %v87, %v86
    %v91 = vpack.c.b16 %v89, %v88
    %v95 = vsel %vm48, %v77, 0
    %97 = vmatprep.subr.bf16.mxu0 0
    %98 = vmatpush1.bf16.msra.mxu0 %v90
    %99 = vmatprep.subr.bf16.mxu0 0
    %100 = vmatpush1.bf16.msra.mxu0 %v91
    %101 = vmatprep.subr.bf16.mxu0 0
    %102 = vmatpush1.bf16.msra.mxu0 0
    %103 = vmatprep.subr.bf16.mxu0 0
    %104 = vmatpush1.bf16.msra.mxu0 0
    %105 = vmatprep.subr.bf16.mxu0 0
    %106 = vmatpush1.bf16.msra.mxu0 0
    %107 = vmatprep.subr.bf16.mxu0 0
    %108 = vmatpush1.bf16.msra.mxu0 0
    %109 = vmatprep.subr.bf16.mxu0 0
    %110 = vmatpush1.bf16.msra.mxu0 0
    %111 = vmatprep.subr.bf16.mxu0 0
    %112 = vmatpush1.bf16.msra.mxu0 0
    %113 = vmatprep.subr.bf16.mxu0 0
    %114 = vmatpush1.bf16.msra.mxu0 0
    %115 = vmatprep.subr.bf16.mxu0 0
    %116 = vmatpush1.bf16.msra.mxu0 0
    %117 = vmatprep.subr.bf16.mxu0 0
    %118 = vmatpush1.bf16.msra.mxu0 0
    %119 = vmatprep.subr.bf16.mxu0 0
    %120 = vmatpush1.bf16.msra.mxu0 0
    %121 = vmatprep.subr.bf16.mxu0 0
    %122 = vmatpush1.bf16.msra.mxu0 0
    %123 = vmatprep.subr.bf16.mxu0 0
    %124 = vmatpush1.bf16.msra.mxu0 0
    %125 = vmatprep.subr.bf16.mxu0 0
    %126 = vmatpush1.bf16.msra.mxu0 0
    %127 = vmatprep.subr.bf16.mxu0 0
    %128 = vmatpush1.bf16.msra.mxu0 0
    %129 = vmatprep.mubr.bf16.mxu0 0
    %130 = vmatmul.mubr.bf16.gmra.mrb[0].mxu0 %v95
    %v131 = vpop.f32.mrb[0].mxu0
    %v132 = vadd.f32 0.0, %v131
    %v133 = vpop.f32.mrb[0].mxu0
    %v134 = vpop.f32.mrb[0].mxu0
    %v135 = vpop.f32.mrb[0].mxu0
    %136 = vdwg.mxu0
    %vm137 = vcmask 785408
    %138 = vst.msk [vmem:[#allocation7] sm:$0xff] %vm137, %v132
    // Predicated region
    $region26: #{tpu_custom_call.1} parent=1 // pred_check
      _
    $region27: #{tpu_custom_call.1} parent=1 // pred_check_branch
      %140 = sbr.rel (0) target = $region29
    $region28: #{tpu_custom_call.1} parent=1 // pred_region
      %s142 = ssub.s32 128, 128
      %143 = vsyncadd [#allocation4], %s142
      %s145 = sshll.u32 [#allocation7], 4
      %s146 = int_to_ptr.vmem [resolvable:$true] %s145
      %148 = dma.vmem_to_hbm [thread:$0]  %s146, 128, %s4, [#allocation4]
    $region29: #{tpu_custom_call.1} parent=1 // pred_fallthru
      _
    // Predicated region
    $region30: #{tpu_custom_call.1} parent=1 // pred_check
      _
    $region31: #{tpu_custom_call.1} parent=1 // pred_check_branch
      %150 = sbr.rel (0) target = $region33
    $region32: #{tpu_custom_call.1} parent=1 // pred_region
      %151 = dma.done [#allocation4], 128
    $region33: #{tpu_custom_call.1} parent=1 // pred_fallthru
      _
    %152 = vsyncpa [#allocation3], 1
    %153 = vsyncpa [#allocation6], 1
    %154 = vsyncpa [#allocation4], 1

</llo_original>
